<compile_context>
chip_gen: v6e
topology: v6e:2x2x1
jax: 0.10.0
libtpu: 0.0.40
codegen_flags: <defaults>
</compile_context>

<pallas_src>
import math

import jax
import jax.numpy as jnp
from jax.experimental import pallas as pl
from jax.experimental.pallas import tpu as pltpu

# Shapes consistent with the module (module default hidden_dim=8; 32 keeps it small but
# sublane-friendly).  Coordinates: (B, L, 1) with B*L = 128 = one full lane tile.
IN_DIM = 1
OUT_DIM = 1
HIDDEN = 32
NUM_FREQ = HIDDEN // 2          # FourierFeatures out_channels -> feature_dim = HIDDEN
NUM_LAYERS = 3
OMEGA = 30.0                    # hidden_omega_0
BN_EPS = 1e-5                   # nn.BatchNorm1d default
TWO_PI = 2.0 * math.pi

BATCH = 2
SEQ = 64                        # N = BATCH * SEQ = 128 samples

# Packed per-channel slab layout (HIDDEN rows x 8 columns, f32):
#   col 0/1: OMEGA*gamma1, OMEGA*beta1
#   col 2/3: OMEGA*gamma2, OMEGA*beta2
#   col 4/5: OMEGA*gamma3, OMEGA*beta3
#   col 6  : w_out (HIDDEN,)
#   col 7  : rows [0:NUM_FREQ] = 2*pi*freq, row NUM_FREQ = b_out
_SLAB_COLS = 8


def _bn_relu(z, og, ob):
    """ReLU(omega * BatchNorm1d(z)) with training-mode batch statistics, fused.

    z : (H, N)  channels on sublanes, samples on lanes.
    og: (H, 1)  OMEGA * gamma   (omega pre-folded in the wrapper)
    ob: (H, 1)  OMEGA * beta

    Two independent cross-lane reductions (sum, sum of squares) -> per-channel
    scale/shift on (H,1), then a single wide FMA + relu on (H,N).
    Note: the linear bias before BN is dropped (cancels exactly under mean subtraction).
    """
    inv_n = 1.0 / z.shape[1]
    s1 = jnp.sum(z, axis=1, keepdims=True)                 # (H, 1)
    s2 = jnp.sum(z * z, axis=1, keepdims=True)             # (H, 1)
    mu = s1 * inv_n
    var = jnp.maximum(s2 * inv_n - mu * mu, 0.0)           # biased variance, clamped >= 0
    scale = og * jax.lax.rsqrt(var + BN_EPS)               # (H, 1)
    shift = ob - scale * mu                                 # (H, 1)
    return jnp.maximum(z * scale + shift, 0.0)              # activ='relu'


def _relu_rff_kernel(coords_ref, w_ref, slab_ref, o_ref):
    # Transposed layout: coords_ref is (IN_DIM=1, N); samples live on the lane axis.
    x = coords_ref[...]                                     # (1, N)
    slab = slab_ref[...]                                    # (H, 8)

    # FourierFeatures: IN_DIM == 1, so einsum('oi,bli->blo') is a broadcast multiply.
    # 2*pi is already folded into the stored frequencies.
    freq2pi = slab[:NUM_FREQ, 7:8]                          # (F, 1)
    pre = freq2pi * x                                       # (F, N)
    # Sublane concat (16 f32 rows = 2 aligned sublane tiles): no data movement,
    # lets layer 1 be a single K=32 matmul against the unsplit torch weight.
    h = jnp.concatenate([jnp.cos(pre), jnp.sin(pre)], axis=0)   # (H, N)

    # 3 x SineLayer_bn (Linear without bias -> fused BN*omega*affine -> ReLU).
    for j in range(NUM_LAYERS):
        z = jnp.dot(w_ref[j], h, preferred_element_type=jnp.float32)   # (H, N)
        h = _bn_relu(z, slab[:, 2 * j:2 * j + 1], slab[:, 2 * j + 1:2 * j + 2])

    # Final Linear(hidden, 1): VPU multiply + sublane reduce -> lane-dense (1, N) row.
    wout = slab[:, 6:7]                                     # (H, 1)
    bout = slab[NUM_FREQ:NUM_FREQ + 1, 7:8]                 # (1, 1)
    out = jnp.sum(h * wout, axis=0, keepdims=True) + bout
    o_ref[...] = out.astype(o_ref.dtype)


def relu_rff_forward(coords, packed_params):
    """coords: (B, L, IN_DIM) float32 -> (B, L, OUT_DIM), matching relu_rff.forward."""
    b, l, in_dim = coords.shape
    assert in_dim == IN_DIM == 1, "kernel is specialized to the module default input_dim=1"
    n = b * l

    # Layout plumbing in the wrapper (free): samples on the lane axis.
    coords_t = coords.reshape(n, IN_DIM).T                  # (1, N)
    operands = (coords_t,) + tuple(packed_params)           # (coords, w_all, slab)

    cost = pl.CostEstimate(
        flops=2 * HIDDEN * HIDDEN * n * NUM_LAYERS + 12 * HIDDEN * n,
        transcendentals=2 * NUM_FREQ * n + NUM_LAYERS * HIDDEN,
        bytes_accessed=4 * (2 * n + NUM_LAYERS * HIDDEN * HIDDEN + HIDDEN * _SLAB_COLS),
    )

    out_t = pl.pallas_call(
        _relu_rff_kernel,
        out_shape=jax.ShapeDtypeStruct((OUT_DIM, n), coords.dtype),
        # Gridless invocation: whole operands in VMEM, no pipeline skeleton, no
        # double-buffering.  BN batch statistics couple every sample anyway, so the
        # whole batch must live in one invocation.
        in_specs=[pl.BlockSpec(memory_space=pltpu.MemorySpace.VMEM)] * len(operands),
        out_specs=pl.BlockSpec(memory_space=pltpu.MemorySpace.VMEM),
        cost_estimate=cost,
    )(*operands)

    # Lane-dense (OUT_DIM, N) row -> (B, L, OUT_DIM) in the wrapper.
    return out_t.T.reshape(b, l, OUT_DIM)


def init_params(key):
    """Deterministic PyTorch-style init, stored in torch layout (out, in)."""
    ks = jax.random.split(key, 16)
    it = iter(ks)
    uniform = lambda k, shape, bd: jax.random.uniform(k, shape, jnp.float32, -bd, bd)

    p = {}
    p["freq"] = jax.random.normal(next(it), (NUM_FREQ, IN_DIM), jnp.float32)  # N(0,1) buffer
    bound = 1.0 / math.sqrt(HIDDEN)
    for j in (1, 2, 3):
        p[f"w{j}"] = uniform(next(it), (HIDDEN, HIDDEN), bound)
        p[f"b{j}"] = uniform(next(it), (HIDDEN,), bound)
        # BatchNorm affine (PyTorch inits gamma=1, beta=0; perturbed to exercise the path).
        p[f"g{j}"] = 1.0 + 0.1 * jax.random.normal(next(it), (HIDDEN,), jnp.float32)
        p[f"be{j}"] = 0.1 * jax.random.normal(next(it), (HIDDEN,), jnp.float32)
    p["wout"] = uniform(next(it), (OUT_DIM, HIDDEN), bound)
    p["bout"] = uniform(next(it), (OUT_DIM,), bound)
    return p


def pack_params(p):
    """Wrapper-side layout plumbing: stack weights, fold 2*pi and omega, pack all
    per-channel vectors into one (HIDDEN, 8) slab.  The pre-BN linear biases b1/b2/b3
    are intentionally NOT packed: they cancel exactly under BN mean subtraction."""
    w_all = jnp.stack([p["w1"], p["w2"], p["w3"]], axis=0)          # (3, H, H)

    slab = jnp.zeros((HIDDEN, _SLAB_COLS), jnp.float32)
    for j in (1, 2, 3):
        slab = slab.at[:, 2 * (j - 1)].set(OMEGA * p[f"g{j}"])
        slab = slab.at[:, 2 * (j - 1) + 1].set(OMEGA * p[f"be{j}"])
    slab = slab.at[:, 6].set(p["wout"][0])                          # (H,)
    slab = slab.at[:NUM_FREQ, 7].set(TWO_PI * p["freq"][:, 0])      # 2*pi folded in
    slab = slab.at[NUM_FREQ, 7].set(p["bout"][0])
    return (w_all, slab)


def relu_rff_reference(coords, p):
    """Plain-JAX row-major reference matching the PyTorch forward (training-mode BN).
    Keeps the linear biases to verify their exact cancellation in the kernel."""
    b, l, _ = coords.shape
    x = coords.reshape(b * l, IN_DIM)
    pre = x @ p["freq"].T                                   # einsum('oi,bli->blo')
    h = jnp.concatenate([jnp.cos(TWO_PI * pre), jnp.sin(TWO_PI * pre)], axis=-1)
    for j in (1, 2, 3):
        z = h @ p[f"w{j}"].T + p[f"b{j}"]
        mu = z.mean(axis=0)
        var = ((z - mu) ** 2).mean(axis=0)                  # biased, as in BN training
        z_hat = (z - mu) / jnp.sqrt(var + BN_EPS)
        h = jax.nn.relu(OMEGA * (p[f"g{j}"] * z_hat + p[f"be{j}"]))
    out = h @ p["wout"].T + p["bout"]
    return out.reshape(b, l, OUT_DIM)


if __name__ == "__main__":
    key = jax.random.PRNGKey(0)
    k_params, k_x = jax.random.split(key)

    params = init_params(k_params)
    coords = jax.random.uniform(k_x, (BATCH, SEQ, IN_DIM), jnp.float32, -1.0, 1.0)

    out = jax.block_until_ready(relu_rff_forward(coords, pack_params(params)))
    ref = jax.block_until_ready(relu_rff_reference(coords, params))

    assert out.shape == (BATCH, SEQ, OUT_DIM), out.shape
    max_err = float(jnp.max(jnp.abs(out - ref)))
    scale = max(1.0, float(jnp.max(jnp.abs(ref))))
    assert max_err < 2e-2 * scale, f"mismatch vs reference, max_err={max_err}, scale={scale}"

    print("KERNEL_OK")
</pallas_src>

<mosaic_0001>
module attributes {stable_mosaic.version = 11 : i64} {
  func.func @_relu_rff_kernel(%arg0: memref<1x128xf32, #tpu.memory_space<vmem>>, %arg1: memref<3x32x32xf32, #tpu.memory_space<vmem>>, %arg2: memref<32x8xf32, #tpu.memory_space<vmem>>, %arg3: memref<1x128xf32, #tpu.memory_space<vmem>>) attributes {dimension_semantics = [], scalar_prefetch = 0 : i64, scratch_operands = 0 : i64, tpu.core_type = #tpu.core_type<tc>} {
    %c0 = arith.constant 0 : index
    %c0_0 = arith.constant 0 : index
    %0 = vector.load %arg0[%c0, %c0_0] : memref<1x128xf32, #tpu.memory_space<vmem>>, vector<1x128xf32>
    %c0_1 = arith.constant 0 : index
    %c0_2 = arith.constant 0 : index
    %1 = vector.load %arg2[%c0_1, %c0_2] : memref<32x8xf32, #tpu.memory_space<vmem>>, vector<32x8xf32>
    %2 = vector.extract_strided_slice %1 {offsets = [0, 7], sizes = [16, 1], strides = [1, 1]} : vector<32x8xf32> to vector<16x1xf32>
    %3 = vector.broadcast %2 : vector<16x1xf32> to vector<16x128xf32>
    %4 = vector.broadcast %0 : vector<1x128xf32> to vector<16x128xf32>
    %5 = arith.mulf %3, %4 : vector<16x128xf32>
    %6 = math.cos %5 : vector<16x128xf32>
    %7 = math.sin %5 : vector<16x128xf32>
    %8 = tpu.concatenate %6, %7 in 0 : vector<16x128xf32>, vector<16x128xf32> -> vector<32x128xf32>
    %c0_3 = arith.constant 0 : index
    %c0_4 = arith.constant 0 : index
    %c0_5 = arith.constant 0 : index
    %9 = vector.load %arg1[%c0_3, %c0_4, %c0_5] : memref<3x32x32xf32, #tpu.memory_space<vmem>>, vector<1x32x32xf32>
    %10 = vector.shape_cast %9 : vector<1x32x32xf32> to vector<32x32xf32>
    %cst = arith.constant dense<0.000000e+00> : vector<32x128xf32>
    %11 = tpu.matmul %10, %8, %cst {dimension_numbers = #tpu.dot_dimension_numbers<[1], [0], [0], [1], [0, 0, 1, 1], [], []>} : vector<32x32xf32>, vector<32x128xf32>, vector<32x128xf32> -> vector<32x128xf32>
    %12 = vector.extract_strided_slice %1 {offsets = [0, 0], sizes = [32, 1], strides = [1, 1]} : vector<32x8xf32> to vector<32x1xf32>
    %13 = vector.extract_strided_slice %1 {offsets = [0, 1], sizes = [32, 1], strides = [1, 1]} : vector<32x8xf32> to vector<32x1xf32>
    %cst_6 = arith.constant dense<0.000000e+00> : vector<32xf32>
    %14 = vector.multi_reduction <add>, %11, %cst_6 [1] : vector<32x128xf32> to vector<32xf32>
    %15 = vector.shape_cast %14 : vector<32xf32> to vector<32x1xf32>
    %16 = arith.mulf %11, %11 : vector<32x128xf32>
    %cst_7 = arith.constant dense<0.000000e+00> : vector<32xf32>
    %17 = vector.multi_reduction <add>, %16, %cst_7 [1] : vector<32x128xf32> to vector<32xf32>
    %18 = vector.shape_cast %17 : vector<32xf32> to vector<32x1xf32>
    %cst_8 = arith.constant 7.812500e-03 : f32
    %19 = vector.broadcast %cst_8 : f32 to vector<32x1xf32>
    %20 = arith.mulf %15, %19 : vector<32x1xf32>
    %cst_9 = arith.constant 7.812500e-03 : f32
    %21 = vector.broadcast %cst_9 : f32 to vector<32x1xf32>
    %22 = arith.mulf %18, %21 : vector<32x1xf32>
    %23 = arith.mulf %20, %20 : vector<32x1xf32>
    %24 = arith.subf %22, %23 : vector<32x1xf32>
    %cst_10 = arith.constant 0.000000e+00 : f32
    %25 = vector.broadcast %cst_10 : f32 to vector<32x1xf32>
    %26 = arith.maximumf %24, %25 : vector<32x1xf32>
    %cst_11 = arith.constant 9.99999974E-6 : f32
    %27 = vector.broadcast %cst_11 : f32 to vector<32x1xf32>
    %28 = arith.addf %26, %27 : vector<32x1xf32>
    %29 = math.rsqrt %28 : vector<32x1xf32>
    %30 = arith.mulf %12, %29 : vector<32x1xf32>
    %31 = arith.mulf %30, %20 : vector<32x1xf32>
    %32 = arith.subf %13, %31 : vector<32x1xf32>
    %33 = vector.broadcast %30 : vector<32x1xf32> to vector<32x128xf32>
    %34 = arith.mulf %11, %33 : vector<32x128xf32>
    %35 = vector.broadcast %32 : vector<32x1xf32> to vector<32x128xf32>
    %36 = arith.addf %34, %35 : vector<32x128xf32>
    %cst_12 = arith.constant 0.000000e+00 : f32
    %37 = vector.broadcast %cst_12 : f32 to vector<32x128xf32>
    %38 = arith.maximumf %36, %37 : vector<32x128xf32>
    %c1 = arith.constant 1 : index
    %c0_13 = arith.constant 0 : index
    %c0_14 = arith.constant 0 : index
    %39 = vector.load %arg1[%c1, %c0_13, %c0_14] : memref<3x32x32xf32, #tpu.memory_space<vmem>>, vector<1x32x32xf32>
    %40 = vector.shape_cast %39 : vector<1x32x32xf32> to vector<32x32xf32>
    %cst_15 = arith.constant dense<0.000000e+00> : vector<32x128xf32>
    %41 = tpu.matmul %40, %38, %cst_15 {dimension_numbers = #tpu.dot_dimension_numbers<[1], [0], [0], [1], [0, 0, 1, 1], [], []>} : vector<32x32xf32>, vector<32x128xf32>, vector<32x128xf32> -> vector<32x128xf32>
    %42 = vector.extract_strided_slice %1 {offsets = [0, 2], sizes = [32, 1], strides = [1, 1]} : vector<32x8xf32> to vector<32x1xf32>
    %43 = vector.extract_strided_slice %1 {offsets = [0, 3], sizes = [32, 1], strides = [1, 1]} : vector<32x8xf32> to vector<32x1xf32>
    %cst_16 = arith.constant dense<0.000000e+00> : vector<32xf32>
    %44 = vector.multi_reduction <add>, %41, %cst_16 [1] : vector<32x128xf32> to vector<32xf32>
    %45 = vector.shape_cast %44 : vector<32xf32> to vector<32x1xf32>
    %46 = arith.mulf %41, %41 : vector<32x128xf32>
    %cst_17 = arith.constant dense<0.000000e+00> : vector<32xf32>
    %47 = vector.multi_reduction <add>, %46, %cst_17 [1] : vector<32x128xf32> to vector<32xf32>
    %48 = vector.shape_cast %47 : vector<32xf32> to vector<32x1xf32>
    %cst_18 = arith.constant 7.812500e-03 : f32
    %49 = vector.broadcast %cst_18 : f32 to vector<32x1xf32>
    %50 = arith.mulf %45, %49 : vector<32x1xf32>
    %cst_19 = arith.constant 7.812500e-03 : f32
    %51 = vector.broadcast %cst_19 : f32 to vector<32x1xf32>
    %52 = arith.mulf %48, %51 : vector<32x1xf32>
    %53 = arith.mulf %50, %50 : vector<32x1xf32>
    %54 = arith.subf %52, %53 : vector<32x1xf32>
    %cst_20 = arith.constant 0.000000e+00 : f32
    %55 = vector.broadcast %cst_20 : f32 to vector<32x1xf32>
    %56 = arith.maximumf %54, %55 : vector<32x1xf32>
    %cst_21 = arith.constant 9.99999974E-6 : f32
    %57 = vector.broadcast %cst_21 : f32 to vector<32x1xf32>
    %58 = arith.addf %56, %57 : vector<32x1xf32>
    %59 = math.rsqrt %58 : vector<32x1xf32>
    %60 = arith.mulf %42, %59 : vector<32x1xf32>
    %61 = arith.mulf %60, %50 : vector<32x1xf32>
    %62 = arith.subf %43, %61 : vector<32x1xf32>
    %63 = vector.broadcast %60 : vector<32x1xf32> to vector<32x128xf32>
    %64 = arith.mulf %41, %63 : vector<32x128xf32>
    %65 = vector.broadcast %62 : vector<32x1xf32> to vector<32x128xf32>
    %66 = arith.addf %64, %65 : vector<32x128xf32>
    %cst_22 = arith.constant 0.000000e+00 : f32
    %67 = vector.broadcast %cst_22 : f32 to vector<32x128xf32>
    %68 = arith.maximumf %66, %67 : vector<32x128xf32>
    %c2 = arith.constant 2 : index
    %c0_23 = arith.constant 0 : index
    %c0_24 = arith.constant 0 : index
    %69 = vector.load %arg1[%c2, %c0_23, %c0_24] : memref<3x32x32xf32, #tpu.memory_space<vmem>>, vector<1x32x32xf32>
    %70 = vector.shape_cast %69 : vector<1x32x32xf32> to vector<32x32xf32>
    %cst_25 = arith.constant dense<0.000000e+00> : vector<32x128xf32>
    %71 = tpu.matmul %70, %68, %cst_25 {dimension_numbers = #tpu.dot_dimension_numbers<[1], [0], [0], [1], [0, 0, 1, 1], [], []>} : vector<32x32xf32>, vector<32x128xf32>, vector<32x128xf32> -> vector<32x128xf32>
    %72 = vector.extract_strided_slice %1 {offsets = [0, 4], sizes = [32, 1], strides = [1, 1]} : vector<32x8xf32> to vector<32x1xf32>
    %73 = vector.extract_strided_slice %1 {offsets = [0, 5], sizes = [32, 1], strides = [1, 1]} : vector<32x8xf32> to vector<32x1xf32>
    %cst_26 = arith.constant dense<0.000000e+00> : vector<32xf32>
    %74 = vector.multi_reduction <add>, %71, %cst_26 [1] : vector<32x128xf32> to vector<32xf32>
    %75 = vector.shape_cast %74 : vector<32xf32> to vector<32x1xf32>
    %76 = arith.mulf %71, %71 : vector<32x128xf32>
    %cst_27 = arith.constant dense<0.000000e+00> : vector<32xf32>
    %77 = vector.multi_reduction <add>, %76, %cst_27 [1] : vector<32x128xf32> to vector<32xf32>
    %78 = vector.shape_cast %77 : vector<32xf32> to vector<32x1xf32>
    %cst_28 = arith.constant 7.812500e-03 : f32
    %79 = vector.broadcast %cst_28 : f32 to vector<32x1xf32>
    %80 = arith.mulf %75, %79 : vector<32x1xf32>
    %cst_29 = arith.constant 7.812500e-03 : f32
    %81 = vector.broadcast %cst_29 : f32 to vector<32x1xf32>
    %82 = arith.mulf %78, %81 : vector<32x1xf32>
    %83 = arith.mulf %80, %80 : vector<32x1xf32>
    %84 = arith.subf %82, %83 : vector<32x1xf32>
    %cst_30 = arith.constant 0.000000e+00 : f32
    %85 = vector.broadcast %cst_30 : f32 to vector<32x1xf32>
    %86 = arith.maximumf %84, %85 : vector<32x1xf32>
    %cst_31 = arith.constant 9.99999974E-6 : f32
    %87 = vector.broadcast %cst_31 : f32 to vector<32x1xf32>
    %88 = arith.addf %86, %87 : vector<32x1xf32>
    %89 = math.rsqrt %88 : vector<32x1xf32>
    %90 = arith.mulf %72, %89 : vector<32x1xf32>
    %91 = arith.mulf %90, %80 : vector<32x1xf32>
    %92 = arith.subf %73, %91 : vector<32x1xf32>
    %93 = vector.broadcast %90 : vector<32x1xf32> to vector<32x128xf32>
    %94 = arith.mulf %71, %93 : vector<32x128xf32>
    %95 = vector.broadcast %92 : vector<32x1xf32> to vector<32x128xf32>
    %96 = arith.addf %94, %95 : vector<32x128xf32>
    %cst_32 = arith.constant 0.000000e+00 : f32
    %97 = vector.broadcast %cst_32 : f32 to vector<32x128xf32>
    %98 = arith.maximumf %96, %97 : vector<32x128xf32>
    %99 = vector.extract_strided_slice %1 {offsets = [0, 6], sizes = [32, 1], strides = [1, 1]} : vector<32x8xf32> to vector<32x1xf32>
    %100 = vector.extract_strided_slice %1 {offsets = [16, 7], sizes = [1, 1], strides = [1, 1]} : vector<32x8xf32> to vector<1x1xf32>
    %101 = vector.broadcast %99 : vector<32x1xf32> to vector<32x128xf32>
    %102 = arith.mulf %98, %101 : vector<32x128xf32>
    %cst_33 = arith.constant dense<0.000000e+00> : vector<128xf32>
    %103 = vector.multi_reduction <add>, %102, %cst_33 [0] : vector<32x128xf32> to vector<128xf32>
    %104 = vector.shape_cast %103 : vector<128xf32> to vector<1x128xf32>
    %105 = vector.broadcast %100 : vector<1x1xf32> to vector<1x128xf32>
    %106 = arith.addf %104, %105 : vector<1x128xf32>
    %c0_34 = arith.constant 0 : index
    %c0_35 = arith.constant 0 : index
    %107 = vector.load %arg3[%c0_34, %c0_35] : memref<1x128xf32, #tpu.memory_space<vmem>>, vector<1x128xf32>
    tpu.vector_store %arg3[%c0_34, %c0_35], %106 {strides = array<i32>} : memref<1x128xf32, #tpu.memory_space<vmem>>, vector<1x128xf32>,
    return
  }
}

</mosaic_0001>

<llo_original>
// kernel: tpu_custom_call.1
$region0: #{tpu_custom_call.1}
  #allocation0 [shape = 'u32[]', space=smem, size = 0x4, offset = 0x4, fixed_abs, tag = 'smem constant byte address 0x4 - core index']
  #allocation1 [shape = 'u32[144,128]{1,0:T(1,128)}', space=vmem, size = 0x12000, scoped, tag = 'internal scratch']
  %s0 = inlined_call_operand.vmem [shape: f32[1,128], index: 0, kind: input, shape index: {}]
  %s1 = inlined_call_operand.hbm [shape: f32[3,32,32], index: 1, kind: input, shape index: {}]
  %s2 = inlined_call_operand.vmem [shape: f32[32,8], index: 2, kind: input, shape index: {}]
  %s3 = inlined_call_operand.hbm [shape: f32[1,128], index: 3, kind: output, shape index: {}]
  %s4 = sld [smem:[#allocation0]]
  $region26: #{tpu_custom_call.1} parent=0
    _
  %s6 = ssub.s32 1, %s4
  %s7 = scalar_select 0, %s6, %s4
  $region1: #{tpu_custom_call.1} parent=0
    #allocation2 [shape = 'u8[49152]{0}', space=vmem, size = 0xc000, scoped, tag = 'input window, operand 1, single buffered']
    #allocation3 [shape = 's32[1]{0}', space=sflag, size = 0x4, scoped, tag = 'scoped memory for tpu_custom_call.1']
    #allocation4 [shape = 's32[1]{0}', space=sflag, size = 0x4, scoped, tag = 'scoped memory for tpu_custom_call.1']
    #allocation5 [shape = 'u8[512]{0}', space=vmem, size = 0x400, scoped, tag = 'output window, operand 0, single buffered']
    %8 = vsyncpa [#allocation3], 0
    %9 = vsyncpa [#allocation4], 0
    // Predicated region
    $region2: #{tpu_custom_call.1} parent=1 // pred_check
      _
    $region3: #{tpu_custom_call.1} parent=1 // pred_check_branch
      %11 = sbr.rel (0) target = $region5
    $region4: #{tpu_custom_call.1} parent=1 // pred_region
      _
    $region5: #{tpu_custom_call.1} parent=1 // pred_fallthru
      _
    // Predicated region
    $region6: #{tpu_custom_call.1} parent=1 // pred_check
      _
    $region7: #{tpu_custom_call.1} parent=1 // pred_check_branch
      %13 = sbr.rel (0) target = $region9
    $region8: #{tpu_custom_call.1} parent=1 // pred_region
      %s15 = ssub.s32 1536, 1536
      %16 = vsyncadd [#allocation3], %s15
      %s17 = sshll.u32 [#allocation2], 4
      %s18 = int_to_ptr.vmem [resolvable:$true] %s17
      %23 = dma.hbm_to_vmem [thread:$0]  %s1, 1536, %s18, [#allocation3], 128, 128, 8
    $region9: #{tpu_custom_call.1} parent=1 // pred_fallthru
      _
    // Predicated region
    $region10: #{tpu_custom_call.1} parent=1 // pred_check
      _
    $region11: #{tpu_custom_call.1} parent=1 // pred_check_branch
      %25 = sbr.rel (0) target = $region13
    $region12: #{tpu_custom_call.1} parent=1 // pred_region
      _
    $region13: #{tpu_custom_call.1} parent=1 // pred_fallthru
      _
    // Predicated region
    $region14: #{tpu_custom_call.1} parent=1 // pred_check
      _
    $region15: #{tpu_custom_call.1} parent=1 // pred_check_branch
      %27 = sbr.rel (0) target = $region17
    $region16: #{tpu_custom_call.1} parent=1 // pred_region
      %28 = dma.done [#allocation3], 1536
    $region17: #{tpu_custom_call.1} parent=1 // pred_fallthru
      _
    %v29 = vld [vmem:[%s0] sm:$0x1]
    %v30 = vld [vmem:[%s2] sm:$0xff]
    %v31 = vld [vmem:[%s2 + $0x8] sm:$0xff]
    %v32 = vld [vmem:[%s2 + $0x10] sm:$0xff]
    %v33 = vld [vmem:[%s2 + $0x18] sm:$0xff]
    %35 = vset.pattern.permute.xlu0 7
    %36 = vperm.xlu0 %35, %v30
    %v37 = vpop.permute.xlu0 %36
    %40 = vset.pattern.permute.xlu0 7
    %41 = vperm.xlu0 %40, %v31
    %v42 = vpop.permute.xlu0 %41
    %v45 = vlaneseq
    %v46 = vshrl.u32 %v45, 7
    %v47 = vsub.s32 0, %v46
    %v48 = vrot.slane %v29, %v47
    %v50 = vmul.f32 %v37, %v48
    %v51 = vmul.f32 %v42, %v48
    %v52 = vand.u32 2147483647, %v50
    %vm53 = vcmp.le.f32.partialorder %v52, 0.7853982
    %vm54 = vcmp.lt.s32.totalorder %v50, 0
    %v55 = vand.u32 %v50, 2139095040
    %v56 = vshrl.u32 %v55, 23
    %v57 = vsub.s32 %v56, 127
    %v58 = vand.u32 2147483647, %v50
    %v59 = vand.u32 %v58, 8388607
    %v60 = vor.u32 %v59, 8388608
    %v61 = vsub.s32 0, %v60
    %v62 = vadd.s32 %v57, 1
    %vm63 = vcmp.gt.s32.totalorder %v62, 0
    %v64 = vsel %vm63, %v62, 0
    %v65 = vshrl.u32 %v64, 5
    %v66 = vand.u32 %v64, 31
    %v67 = vsub.s32 32, %v66
    %v68 = vshrl.u32 683565275, %v67
    %v69 = vshll.u32 683565275, %v66
    %v70 = vshrl.u32 2475754826, %v67
    %v71 = vor.u32 %v69, %v70
    %v72 = vshll.u32 2475754826, %v66
    %v73 = vshrl.u32 2131351028, %v67
    %v74 = vor.u32 %v72, %v73
    %v75 = vshll.u32 2131351028, %v66
    %v76 = vshrl.u32 2102212464, %v67
    %v77 = vor.u32 %v75, %v76
    %v78 = vshll.u32 2102212464, %v66
    %v79 = vshrl.u32 920167782, %v67
    %v80 = vor.u32 %v78, %v79
    %v81 = vshll.u32 920167782, %v66
    %v82 = vshrl.u32 1326507024, %v67
    %v83 = vor.u32 %v81, %v82
    %vm84 = vcmp.lt.s32.totalorder %v65, 1
    %vm85 = vcmp.lt.s32.totalorder %v65, 2
    %vm86 = vcmp.lt.s32.totalorder %v65, 3
    %vm87 = vcmp.lt.s32.totalorder %v65, 4
    %v88 = vsel %vm84, %v68, %v71
    %v89 = vsel %vm87, %v77, 2102212464
    %v90 = vsel %vm86, %v74, %v89
    %v91 = vsel %vm85, %v88, %v90
    %v92 = vsel %vm84, %v71, %v74
    %v93 = vsel %vm87, %v80, 920167782
    %v94 = vsel %vm86, %v77, %v93
    %v95 = vsel %vm85, %v92, %v94
    %v96 = vsel %vm84, %v74, %v77
    %v97 = vsel %vm87, %v83, 1326507024
    %v98 = vsel %vm86, %v80, %v97
    %v99 = vsel %vm85, %v96, %v98
    %v100 = vshll.u32 %v60, 8
    %v101 = vmul.u32.u64.compose %v100, %v99
    %v102 = vextract.low.u32 %v101
    %v103 = vextract.high.u32 %v101
    %v104 = vmul.u32.u64.compose %v100, %v95
    %v105 = vextract.low.u32 %v104
    %v106 = vextract.high.u32 %v104
    %v107 = vmul.u32 %v100, %v91
    %v108 = vadd.s32 %v103, %v105
    %vm109 = vc.u32 %v103, %v105
    %v110 = vadd.s32 %v106, 1
    %v111 = vsel %vm109, %v110, %v106
    %v112 = vadd.s32 %v107, %v111
    %v113 = vadd.s32 %v112, 536870912
    %v114 = vshrl.u32 %v113, 30
    %v115 = vshll.u32 %v114, 30
    %v116 = vsub.s32 %v112, %v115
    %vm117 = vcmp.lt.s32.totalorder %v116, 0
    %v118 = vsub.s32 0, %v116
    %v119 = vsel %vm117, %v118, %v116
    %v120 = vclz %v119
    %v121 = vsub.s32 %v120, 2
    %vm122 = vcmp.gt.s32.totalorder 0, %v121
    %v123 = vsel %vm122, 0, %v121
    %v124 = vsub.s32 32, %v123
    %v125 = vshll.u32 %v116, %v123
    %v126 = vshrl.u32 %v108, %v124
    %v127 = vor.u32 %v125, %v126
    %v128 = vsub.s32 4294967266, %v123
    %v129 = vadd.s32 %v128, 127
    %v130 = vshll.u32 %v129, 23
    %v131 = vor.u32 4788187, %v130
    %v132 = vand.u32 2147483647, %v131
    %v134 = vcvt.s32.f32 %v127
    %v135 = vmul.f32 %v134, %v132
    %v136 = vxor.u32 %v135, 2147483648
    %v137 = vsel %vm54, %v136, %v135
    %v138 = vsub.s32 4, %v114
    %v139 = vsel %vm54, %v138, %v114
    %v140 = vsel %vm53, %v50, %v137
    %v141 = vsel %vm53, 0, %v139
    %v142 = vcosq.f32.pop %v140
    %v143 = vsinq.f32.pop %v140
    %vm144 = vweird.f32 %v50
    %v145 = vand.u32 %v141, 3
    %vm146 = vcmp.lt.s32.totalorder %v145, 2
    %vm147 = vcmp.eq.s32.totalorder %v145, 0
    %v148 = vxor.u32 %v143, 2147483648
    %v149 = vsel %vm147, %v142, %v148
    %vm150 = vcmp.eq.s32.totalorder %v145, 2
    %v151 = vxor.u32 %v142, 2147483648
    %v152 = vsel %vm150, %v151, %v143
    %v153 = vsel %vm146, %v149, %v152
    %v154 = vsel %vm144, nan, %v153
    %v155 = vand.u32 2147483647, %v51
    %vm156 = vcmp.le.f32.partialorder %v155, 0.7853982
    %vm157 = vcmp.lt.s32.totalorder %v51, 0
    %v158 = vand.u32 %v51, 2139095040
    %v159 = vshrl.u32 %v158, 23
    %v160 = vsub.s32 %v159, 127
    %v161 = vand.u32 2147483647, %v51
    %v162 = vand.u32 %v161, 8388607
    %v163 = vor.u32 %v162, 8388608
    %v164 = vsub.s32 0, %v163
    %v165 = vadd.s32 %v160, 1
    %vm166 = vcmp.gt.s32.totalorder %v165, 0
    %v167 = vsel %vm166, %v165, 0
    %v168 = vshrl.u32 %v167, 5
    %v169 = vand.u32 %v167, 31
    %v170 = vsub.s32 32, %v169
    %v171 = vshrl.u32 683565275, %v170
    %v172 = vshll.u32 683565275, %v169
    %v173 = vshrl.u32 2475754826, %v170
    %v174 = vor.u32 %v172, %v173
    %v175 = vshll.u32 2475754826, %v169
    %v176 = vshrl.u32 2131351028, %v170
    %v177 = vor.u32 %v175, %v176
    %v178 = vshll.u32 2131351028, %v169
    %v179 = vshrl.u32 2102212464, %v170
    %v180 = vor.u32 %v178, %v179
    %v181 = vshll.u32 2102212464, %v169
    %v182 = vshrl.u32 920167782, %v170
    %v183 = vor.u32 %v181, %v182
    %v184 = vshll.u32 920167782, %v169
    %v185 = vshrl.u32 1326507024, %v170
    %v186 = vor.u32 %v184, %v185
    %vm187 = vcmp.lt.s32.totalorder %v168, 1
    %vm188 = vcmp.lt.s32.totalorder %v168, 2
    %vm189 = vcmp.lt.s32.totalorder %v168, 3
    %vm190 = vcmp.lt.s32.totalorder %v168, 4
    %v191 = vsel %vm187, %v171, %v174
    %v192 = vsel %vm190, %v180, 2102212464
    %v193 = vsel %vm189, %v177, %v192
    %v194 = vsel %vm188, %v191, %v193
    %v195 = vsel %vm187, %v174, %v177
    %v196 = vsel %vm190, %v183, 920167782
    %v197 = vsel %vm189, %v180, %v196
    %v198 = vsel %vm188, %v195, %v197
    %v199 = vsel %vm187, %v177, %v180
    %v200 = vsel %vm190, %v186, 1326507024
    %v201 = vsel %vm189, %v183, %v200
    %v202 = vsel %vm188, %v199, %v201
    %v203 = vshll.u32 %v163, 8
    %v204 = vmul.u32.u64.compose %v203, %v202
    %v205 = vextract.low.u32 %v204
    %v206 = vextract.high.u32 %v204
    %v207 = vmul.u32.u64.compose %v203, %v198
    %v208 = vextract.low.u32 %v207
    %v209 = vextract.high.u32 %v207
    %v210 = vmul.u32 %v203, %v194
    %v211 = vadd.s32 %v206, %v208
    %vm212 = vc.u32 %v206, %v208
    %v213 = vadd.s32 %v209, 1
    %v214 = vsel %vm212, %v213, %v209
    %v215 = vadd.s32 %v210, %v214
    %v216 = vadd.s32 %v215, 536870912
    %v217 = vshrl.u32 %v216, 30
    %v218 = vshll.u32 %v217, 30
    %v219 = vsub.s32 %v215, %v218
    %vm220 = vcmp.lt.s32.totalorder %v219, 0
    %v221 = vsub.s32 0, %v219
    %v222 = vsel %vm220, %v221, %v219
    %v223 = vclz %v222
    %v224 = vsub.s32 %v223, 2
    %vm225 = vcmp.gt.s32.totalorder 0, %v224
    %v226 = vsel %vm225, 0, %v224
    %v227 = vsub.s32 32, %v226
    %v228 = vshll.u32 %v219, %v226
    %v229 = vshrl.u32 %v211, %v227
    %v230 = vor.u32 %v228, %v229
    %v231 = vsub.s32 4294967266, %v226
    %v232 = vadd.s32 %v231, 127
    %v233 = vshll.u32 %v232, 23
    %v234 = vor.u32 4788187, %v233
    %v235 = vand.u32 2147483647, %v234
    %v237 = vcvt.s32.f32 %v230
    %v238 = vmul.f32 %v237, %v235
    %v239 = vxor.u32 %v238, 2147483648
    %v240 = vsel %vm157, %v239, %v238
    %v241 = vsub.s32 4, %v217
    %v242 = vsel %vm157, %v241, %v217
    %v243 = vsel %vm156, %v51, %v240
    %v244 = vsel %vm156, 0, %v242
    %v245 = vcosq.f32.pop %v243
    %v246 = vsinq.f32.pop %v243
    %vm247 = vweird.f32 %v51
    %v248 = vand.u32 %v244, 3
    %vm249 = vcmp.lt.s32.totalorder %v248, 2
    %vm250 = vcmp.eq.s32.totalorder %v248, 0
    %v251 = vxor.u32 %v246, 2147483648
    %v252 = vsel %vm250, %v245, %v251
    %vm253 = vcmp.eq.s32.totalorder %v248, 2
    %v254 = vxor.u32 %v245, 2147483648
    %v255 = vsel %vm253, %v254, %v246
    %v256 = vsel %vm249, %v252, %v255
    %v257 = vsel %vm247, nan, %v256
    %v258 = vand.u32 2147483647, %v50
    %vm259 = vcmp.le.f32.partialorder %v258, 0.7853982
    %vm260 = vcmp.lt.s32.totalorder %v50, 0
    %v261 = vand.u32 %v50, 2139095040
    %v262 = vshrl.u32 %v261, 23
    %v263 = vsub.s32 %v262, 127
    %v264 = vand.u32 2147483647, %v50
    %v265 = vand.u32 %v264, 8388607
    %v266 = vor.u32 %v265, 8388608
    %v267 = vsub.s32 0, %v266
    %v268 = vadd.s32 %v263, 1
    %vm269 = vcmp.gt.s32.totalorder %v268, 0
    %v270 = vsel %vm269, %v268, 0
    %v271 = vshrl.u32 %v270, 5
    %v272 = vand.u32 %v270, 31
    %v273 = vsub.s32 32, %v272
    %v274 = vshrl.u32 683565275, %v273
    %v275 = vshll.u32 683565275, %v272
    %v276 = vshrl.u32 2475754826, %v273
    %v277 = vor.u32 %v275, %v276
    %v278 = vshll.u32 2475754826, %v272
    %v279 = vshrl.u32 2131351028, %v273
    %v280 = vor.u32 %v278, %v279
    %v281 = vshll.u32 2131351028, %v272
    %v282 = vshrl.u32 2102212464, %v273
    %v283 = vor.u32 %v281, %v282
    %v284 = vshll.u32 2102212464, %v272
    %v285 = vshrl.u32 920167782, %v273
    %v286 = vor.u32 %v284, %v285
    %v287 = vshll.u32 920167782, %v272
    %v288 = vshrl.u32 1326507024, %v273
    %v289 = vor.u32 %v287, %v288
    %vm290 = vcmp.lt.s32.totalorder %v271, 1
    %vm291 = vcmp.lt.s32.totalorder %v271, 2
    %vm292 = vcmp.lt.s32.totalorder %v271, 3
    %vm293 = vcmp.lt.s32.totalorder %v271, 4
    %v294 = vsel %vm290, %v274, %v277
    %v295 = vsel %vm293, %v283, 2102212464
    %v296 = vsel %vm292, %v280, %v295
    %v297 = vsel %vm291, %v294, %v296
    %v298 = vsel %vm290, %v277, %v280
    %v299 = vsel %vm293, %v286, 920167782
    %v300 = vsel %vm292, %v283, %v299
    %v301 = vsel %vm291, %v298, %v300
    %v302 = vsel %vm290, %v280, %v283
    %v303 = vsel %vm293, %v289, 1326507024
    %v304 = vsel %vm292, %v286, %v303
    %v305 = vsel %vm291, %v302, %v304
    %v306 = vshll.u32 %v266, 8
    %v307 = vmul.u32.u64.compose %v306, %v305
    %v308 = vextract.low.u32 %v307
    %v309 = vextract.high.u32 %v307
    %v310 = vmul.u32.u64.compose %v306, %v301
    %v311 = vextract.low.u32 %v310
    %v312 = vextract.high.u32 %v310
    %v313 = vmul.u32 %v306, %v297
    %v314 = vadd.s32 %v309, %v311
    %vm315 = vc.u32 %v309, %v311
    %v316 = vadd.s32 %v312, 1
    %v317 = vsel %vm315, %v316, %v312
    %v318 = vadd.s32 %v313, %v317
    %v319 = vadd.s32 %v318, 536870912
    %v320 = vshrl.u32 %v319, 30
    %v321 = vshll.u32 %v320, 30
    %v322 = vsub.s32 %v318, %v321
    %vm323 = vcmp.lt.s32.totalorder %v322, 0
    %v324 = vsub.s32 0, %v322
    %v325 = vsel %vm323, %v324, %v322
    %v326 = vclz %v325
    %v327 = vsub.s32 %v326, 2
    %vm328 = vcmp.gt.s32.totalorder 0, %v327
    %v329 = vsel %vm328, 0, %v327
    %v330 = vsub.s32 32, %v329
    %v331 = vshll.u32 %v322, %v329
    %v332 = vshrl.u32 %v314, %v330
    %v333 = vor.u32 %v331, %v332
    %v334 = vsub.s32 4294967266, %v329
    %v335 = vadd.s32 %v334, 127
    %v336 = vshll.u32 %v335, 23
    %v337 = vor.u32 4788187, %v336
    %v338 = vand.u32 2147483647, %v337
    %v340 = vcvt.s32.f32 %v333
    %v341 = vmul.f32 %v340, %v338
    %v342 = vxor.u32 %v341, 2147483648
    %v343 = vsel %vm260, %v342, %v341
    %v344 = vsub.s32 4, %v320
    %v345 = vsel %vm260, %v344, %v320
    %v346 = vsel %vm259, %v50, %v343
    %v347 = vsel %vm259, 0, %v345
    %v348 = vcosq.f32.pop %v346
    %v349 = vsinq.f32.pop %v346
    %vm350 = vweird.f32 %v50
    %v351 = vadd.s32 %v347, 3
    %v352 = vand.u32 %v351, 3
    %vm353 = vcmp.lt.s32.totalorder %v352, 2
    %vm354 = vcmp.eq.s32.totalorder %v352, 0
    %v355 = vxor.u32 %v349, 2147483648
    %v356 = vsel %vm354, %v348, %v355
    %vm357 = vcmp.eq.s32.totalorder %v352, 2
    %v358 = vxor.u32 %v348, 2147483648
    %v359 = vsel %vm357, %v358, %v349
    %v360 = vsel %vm353, %v356, %v359
    %v361 = vsel %vm350, nan, %v360
    %v362 = vand.u32 2147483647, %v51
    %vm363 = vcmp.le.f32.partialorder %v362, 0.7853982
    %vm364 = vcmp.lt.s32.totalorder %v51, 0
    %v365 = vand.u32 %v51, 2139095040
    %v366 = vshrl.u32 %v365, 23
    %v367 = vsub.s32 %v366, 127
    %v368 = vand.u32 2147483647, %v51
    %v369 = vand.u32 %v368, 8388607
    %v370 = vor.u32 %v369, 8388608
    %v371 = vsub.s32 0, %v370
    %v372 = vadd.s32 %v367, 1
    %vm373 = vcmp.gt.s32.totalorder %v372, 0
    %v374 = vsel %vm373, %v372, 0
    %v375 = vshrl.u32 %v374, 5
    %v376 = vand.u32 %v374, 31
    %v377 = vsub.s32 32, %v376
    %v378 = vshrl.u32 683565275, %v377
    %v379 = vshll.u32 683565275, %v376
    %v380 = vshrl.u32 2475754826, %v377
    %v381 = vor.u32 %v379, %v380
    %v382 = vshll.u32 2475754826, %v376
    %v383 = vshrl.u32 2131351028, %v377
    %v384 = vor.u32 %v382, %v383
    %v385 = vshll.u32 2131351028, %v376
    %v386 = vshrl.u32 2102212464, %v377
    %v387 = vor.u32 %v385, %v386
    %v388 = vshll.u32 2102212464, %v376
    %v389 = vshrl.u32 920167782, %v377
    %v390 = vor.u32 %v388, %v389
    %v391 = vshll.u32 920167782, %v376
    %v392 = vshrl.u32 1326507024, %v377
    %v393 = vor.u32 %v391, %v392
    %vm394 = vcmp.lt.s32.totalorder %v375, 1
    %vm395 = vcmp.lt.s32.totalorder %v375, 2
    %vm396 = vcmp.lt.s32.totalorder %v375, 3
    %vm397 = vcmp.lt.s32.totalorder %v375, 4
    %v398 = vsel %vm394, %v378, %v381
    %v399 = vsel %vm397, %v387, 2102212464
    %v400 = vsel %vm396, %v384, %v399
    %v401 = vsel %vm395, %v398, %v400
    %v402 = vsel %vm394, %v381, %v384
    %v403 = vsel %vm397, %v390, 920167782
    %v404 = vsel %vm396, %v387, %v403
    %v405 = vsel %vm395, %v402, %v404
    %v406 = vsel %vm394, %v384, %v387
    %v407 = vsel %vm397, %v393, 1326507024
    %v408 = vsel %vm396, %v390, %v407
    %v409 = vsel %vm395, %v406, %v408
    %v410 = vshll.u32 %v370, 8
    %v411 = vmul.u32.u64.compose %v410, %v409
    %v412 = vextract.low.u32 %v411
    %v413 = vextract.high.u32 %v411
    %v414 = vmul.u32.u64.compose %v410, %v405
    %v415 = vextract.low.u32 %v414
    %v416 = vextract.high.u32 %v414
    %v417 = vmul.u32 %v410, %v401
    %v418 = vadd.s32 %v413, %v415
    %vm419 = vc.u32 %v413, %v415
    %v420 = vadd.s32 %v416, 1
    %v421 = vsel %vm419, %v420, %v416
    %v422 = vadd.s32 %v417, %v421
    %v423 = vadd.s32 %v422, 536870912
    %v424 = vshrl.u32 %v423, 30
    %v425 = vshll.u32 %v424, 30
    %v426 = vsub.s32 %v422, %v425
    %vm427 = vcmp.lt.s32.totalorder %v426, 0
    %v428 = vsub.s32 0, %v426
    %v429 = vsel %vm427, %v428, %v426
    %v430 = vclz %v429
    %v431 = vsub.s32 %v430, 2
    %vm432 = vcmp.gt.s32.totalorder 0, %v431
    %v433 = vsel %vm432, 0, %v431
    %v434 = vsub.s32 32, %v433
    %v435 = vshll.u32 %v426, %v433
    %v436 = vshrl.u32 %v418, %v434
    %v437 = vor.u32 %v435, %v436
    %v438 = vsub.s32 4294967266, %v433
    %v439 = vadd.s32 %v438, 127
    %v440 = vshll.u32 %v439, 23
    %v441 = vor.u32 4788187, %v440
    %v442 = vand.u32 2147483647, %v441
    %v444 = vcvt.s32.f32 %v437
    %v445 = vmul.f32 %v444, %v442
    %v446 = vxor.u32 %v445, 2147483648
    %v447 = vsel %vm364, %v446, %v445
    %v448 = vsub.s32 4, %v424
    %v449 = vsel %vm364, %v448, %v424
    %v450 = vsel %vm363, %v51, %v447
    %v451 = vsel %vm363, 0, %v449
    %v452 = vcosq.f32.pop %v450
    %v453 = vsinq.f32.pop %v450
    %vm454 = vweird.f32 %v51
    %v455 = vadd.s32 %v451, 3
    %v456 = vand.u32 %v455, 3
    %vm457 = vcmp.lt.s32.totalorder %v456, 2
    %vm458 = vcmp.eq.s32.totalorder %v456, 0
    %v459 = vxor.u32 %v453, 2147483648
    %v460 = vsel %vm458, %v452, %v459
    %vm461 = vcmp.eq.s32.totalorder %v456, 2
    %v462 = vxor.u32 %v452, 2147483648
    %v463 = vsel %vm461, %v462, %v453
    %v464 = vsel %vm457, %v460, %v463
    %v465 = vsel %vm454, nan, %v464
    %v466 = vld [vmem:[#allocation2] sm:$0xff]
    %v467 = vld [vmem:[#allocation2 + $0x8] sm:$0xff]
    %v468 = vld [vmem:[#allocation2 + $0x10] sm:$0xff]
    %v469 = vld [vmem:[#allocation2 + $0x18] sm:$0xff]
    %vm470 = vcmask 261120
    %v472 = vsel %vm470, %v466, 0
    %v475 = vsel %vm470, %v467, 0
    %v478 = vsel %vm470, %v468, 0
    %v481 = vsel %vm470, %v469, 0
    %483 = vmatprep.subr.mxu0 0.0
    %484 = vmatpush1.msra.mxu0 0.0
    %485 = vmatprep.subr.mxu0 0.0
    %486 = vmatpush1.msra.mxu0 0.0
    %487 = vmatprep.subr.mxu0 0.0
    %488 = vmatpush1.msra.mxu0 0.0
    %489 = vmatprep.subr.mxu0 0.0
    %490 = vmatpush1.msra.mxu0 0.0
    %491 = vmatprep.subr.mxu0 0.0
    %492 = vmatpush1.msra.mxu0 0.0
    %493 = vmatprep.subr.mxu0 0.0
    %494 = vmatpush1.msra.mxu0 0.0
    %495 = vmatprep.subr.mxu0 0.0
    %496 = vmatpush1.msra.mxu0 0.0
    %497 = vmatprep.subr.mxu0 0.0
    %498 = vmatpush1.msra.mxu0 0.0
    %499 = vmatprep.subr.mxu0 0.0
    %500 = vmatpush1.msra.mxu0 0.0
    %501 = vmatprep.subr.mxu0 0.0
    %502 = vmatpush1.msra.mxu0 0.0
    %503 = vmatprep.subr.mxu0 0.0
    %504 = vmatpush1.msra.mxu0 0.0
    %505 = vmatprep.subr.mxu0 0.0
    %506 = vmatpush1.msra.mxu0 0.0
    %507 = vmatprep.subr.mxu0 0.0
    %508 = vmatpush1.msra.mxu0 %v465
    %509 = vmatprep.subr.mxu0 0.0
    %510 = vmatpush1.msra.mxu0 %v361
    %511 = vmatprep.subr.mxu0 0.0
    %512 = vmatpush1.msra.mxu0 %v257
    %513 = vmatprep.subr.mxu0 0.0
    %514 = vmatpush1.msra.mxu0 %v154
    %515 = vmatprep.subr.mxu0 0.0
    %516 = vmatpush2.msra.mxu0 0.0
    %517 = vmatprep.subr.mxu0 0.0
    %518 = vmatpush2.msra.mxu0 0.0
    %519 = vmatprep.subr.mxu0 0.0
    %520 = vmatpush2.msra.mxu0 0.0
    %521 = vmatprep.subr.mxu0 0.0
    %522 = vmatpush2.msra.mxu0 0.0
    %523 = vmatprep.subr.mxu0 0.0
    %524 = vmatpush2.msra.mxu0 0.0
    %525 = vmatprep.subr.mxu0 0.0
    %526 = vmatpush2.msra.mxu0 0.0
    %527 = vmatprep.subr.mxu0 0.0
    %528 = vmatpush2.msra.mxu0 0.0
    %529 = vmatprep.subr.mxu0 0.0
    %530 = vmatpush2.msra.mxu0 0.0
    %531 = vmatprep.subr.mxu0 0.0
    %532 = vmatpush2.msra.mxu0 0.0
    %533 = vmatprep.subr.mxu0 0.0
    %534 = vmatpush2.msra.mxu0 0.0
    %535 = vmatprep.subr.mxu0 0.0
    %536 = vmatpush2.msra.mxu0 0.0
    %537 = vmatprep.subr.mxu0 0.0
    %538 = vmatpush2.msra.mxu0 0.0
    %539 = vmatprep.subr.mxu0 0.0
    %540 = vmatpush2.msra.mxu0 0.0
    %541 = vmatprep.subr.mxu0 0.0
    %542 = vmatpush2.msra.mxu0 0.0
    %543 = vmatprep.subr.mxu0 0.0
    %544 = vmatpush2.msra.mxu0 0.0
    %545 = vmatprep.subr.mxu0 0.0
    %546 = vmatpush2.msra.mxu0 0.0
    %547 = vmatprep.mubr.f32.mxu0 0.0
    %548 = vmatmul.mubr.f32.gmra.mxu0 %v472
    %v549 = vpop.f32.mrf.mxu0
    %v550 = vadd.f32 0.0, %v549
    %v551 = vpop.f32.mrf.mxu0
    %552 = vmatprep.mubr.f32.mxu0 0.0
    %553 = vmatmul.mubr.f32.gmra.mxu0 %v475
    %v554 = vpop.f32.mrf.mxu0
    %v555 = vadd.f32 0.0, %v554
    %v556 = vpop.f32.mrf.mxu0
    %557 = vmatprep.mubr.f32.mxu0 0.0
    %558 = vmatmul.mubr.f32.gmra.mxu0 %v478
    %v559 = vpop.f32.mrf.mxu0
    %v560 = vadd.f32 0.0, %v559
    %v561 = vpop.f32.mrf.mxu0
    %562 = vmatprep.mubr.f32.mxu0 0.0
    %563 = vmatmul.mubr.f32.gmra.mxu0 %v481
    %v564 = vpop.f32.mrf.mxu0
    %v565 = vadd.f32 0.0, %v564
    %v566 = vpop.f32.mrf.mxu0
    %567 = vdwg.mxu0
    %568 = vadd.xlane.f32.xlu0 %v550
    %v569 = vpop.xlane.xlu0 %568
    %570 = vadd.xlane.f32.xlu0 %v555
    %v571 = vpop.xlane.xlu0 %570
    %572 = vadd.xlane.f32.xlu0 %v560
    %v573 = vpop.xlane.xlu0 %572
    %574 = vadd.xlane.f32.xlu0 %v565
    %v575 = vpop.xlane.xlu0 %574
    %v576 = vmul.f32 %v550, %v550
    %v577 = vmul.f32 %v555, %v555
    %v578 = vmul.f32 %v560, %v560
    %v579 = vmul.f32 %v565, %v565
    %580 = vadd.xlane.f32.xlu0 %v576
    %v581 = vpop.xlane.xlu0 %580
    %582 = vadd.xlane.f32.xlu0 %v577
    %v583 = vpop.xlane.xlu0 %582
    %584 = vadd.xlane.f32.xlu0 %v578
    %v585 = vpop.xlane.xlu0 %584
    %586 = vadd.xlane.f32.xlu0 %v579
    %v587 = vpop.xlane.xlu0 %586
    %v588 = vmul.f32 %v569, 0.0078125
    %v589 = vmul.f32 %v571, 0.0078125
    %v590 = vmul.f32 %v573, 0.0078125
    %v591 = vmul.f32 %v575, 0.0078125
    %v592 = vmul.f32 %v581, 0.0078125
    %v593 = vmul.f32 %v583, 0.0078125
    %v594 = vmul.f32 %v585, 0.0078125
    %v595 = vmul.f32 %v587, 0.0078125
    %v596 = vmul.f32 %v588, %v588
    %v597 = vmul.f32 %v589, %v589
    %v598 = vmul.f32 %v590, %v590
    %v599 = vmul.f32 %v591, %v591
    %v600 = vsub.f32 %v592, %v596
    %v601 = vsub.f32 %v593, %v597
    %v602 = vsub.f32 %v594, %v598
    %v603 = vsub.f32 %v595, %v599
    %v604 = vmax.f32 %v600, 0.0
    %v605 = vmax.f32 %v601, 0.0
    %v606 = vmax.f32 %v602, 0.0
    %v607 = vmax.f32 %v603, 0.0
    %v608 = vadd.f32 %v604, 1e-05
    %v609 = vadd.f32 %v605, 1e-05
    %v610 = vadd.f32 %v606, 1e-05
    %v611 = vadd.f32 %v607, 1e-05
    %v612 = vrsqrt.pop %v608
    %v613 = vrsqrt.pop %v609
    %v614 = vrsqrt.pop %v610
    %v615 = vrsqrt.pop %v611
    %v616 = vmul.f32 %v30, %v612
    %v617 = vmul.f32 %v31, %v613
    %v618 = vmul.f32 %v32, %v614
    %v619 = vmul.f32 %v33, %v615
    %v620 = vmul.f32 %v616, %v588
    %v621 = vmul.f32 %v617, %v589
    %v622 = vmul.f32 %v618, %v590
    %v623 = vmul.f32 %v619, %v591
    %628 = vrot.lane.b32.xlu0 %v620, 1
    %v629 = vpop.permute.xlu0 %628
    %630 = vrot.lane.b32.xlu0 %v621, 1
    %v631 = vpop.permute.xlu0 %630
    %632 = vrot.lane.b32.xlu0 %v622, 1
    %v633 = vpop.permute.xlu0 %632
    %634 = vrot.lane.b32.xlu0 %v623, 1
    %v635 = vpop.permute.xlu0 %634
    %v640 = vsub.f32 %v30, %v629
    %v641 = vsub.f32 %v31, %v631
    %v642 = vsub.f32 %v32, %v633
    %v643 = vsub.f32 %v33, %v635
    %645 = vset.pattern.permute.xlu0 0
    %646 = vperm.xlu0 %645, %v616
    %v647 = vpop.permute.xlu0 %646
    %650 = vset.pattern.permute.xlu0 0
    %651 = vperm.xlu0 %650, %v617
    %v652 = vpop.permute.xlu0 %651
    %655 = vset.pattern.permute.xlu0 0
    %656 = vperm.xlu0 %655, %v618
    %v657 = vpop.permute.xlu0 %656
    %660 = vset.pattern.permute.xlu0 0
    %661 = vperm.xlu0 %660, %v619
    %v662 = vpop.permute.xlu0 %661
    %v664 = vmul.f32 %v550, %v647
    %v665 = vmul.f32 %v555, %v652
    %v666 = vmul.f32 %v560, %v657
    %v667 = vmul.f32 %v565, %v662
    %669 = vset.pattern.permute.xlu0 1
    %670 = vperm.xlu0 %669, %v640
    %v671 = vpop.permute.xlu0 %670
    %674 = vset.pattern.permute.xlu0 1
    %675 = vperm.xlu0 %674, %v641
    %v676 = vpop.permute.xlu0 %675
    %679 = vset.pattern.permute.xlu0 1
    %680 = vperm.xlu0 %679, %v642
    %v681 = vpop.permute.xlu0 %680
    %684 = vset.pattern.permute.xlu0 1
    %685 = vperm.xlu0 %684, %v643
    %v686 = vpop.permute.xlu0 %685
    %v688 = vadd.f32 %v664, %v671
    %v689 = vadd.f32 %v665, %v676
    %v690 = vadd.f32 %v666, %v681
    %v691 = vadd.f32 %v667, %v686
    %v692 = vmax.f32 %v688, 0.0
    %v693 = vmax.f32 %v689, 0.0
    %v694 = vmax.f32 %v690, 0.0
    %v695 = vmax.f32 %v691, 0.0
    %s696 = scalar_lea.vmem [#allocation2], 32
    %v697 = vld [vmem:[%s696] sm:$0xff]
    %v698 = vld [vmem:[%s696 + $0x8] sm:$0xff]
    %v699 = vld [vmem:[%s696 + $0x10] sm:$0xff]
    %v700 = vld [vmem:[%s696 + $0x18] sm:$0xff]
    %v702 = vsel %vm470, %v697, 0
    %v705 = vsel %vm470, %v698, 0
    %v708 = vsel %vm470, %v699, 0
    %v711 = vsel %vm470, %v700, 0
    %713 = vmatprep.subr.mxu0 0.0
    %714 = vmatpush1.msra.mxu0 0.0
    %715 = vmatprep.subr.mxu0 0.0
    %716 = vmatpush1.msra.mxu0 0.0
    %717 = vmatprep.subr.mxu0 0.0
    %718 = vmatpush1.msra.mxu0 0.0
    %719 = vmatprep.subr.mxu0 0.0
    %720 = vmatpush1.msra.mxu0 0.0
    %721 = vmatprep.subr.mxu0 0.0
    %722 = vmatpush1.msra.mxu0 0.0
    %723 = vmatprep.subr.mxu0 0.0
    %724 = vmatpush1.msra.mxu0 0.0
    %725 = vmatprep.subr.mxu0 0.0
    %726 = vmatpush1.msra.mxu0 0.0
    %727 = vmatprep.subr.mxu0 0.0
    %728 = vmatpush1.msra.mxu0 0.0
    %729 = vmatprep.subr.mxu0 0.0
    %730 = vmatpush1.msra.mxu0 0.0
    %731 = vmatprep.subr.mxu0 0.0
    %732 = vmatpush1.msra.mxu0 0.0
    %733 = vmatprep.subr.mxu0 0.0
    %734 = vmatpush1.msra.mxu0 0.0
    %735 = vmatprep.subr.mxu0 0.0
    %736 = vmatpush1.msra.mxu0 0.0
    %737 = vmatprep.subr.mxu0 0.0
    %738 = vmatpush1.msra.mxu0 %v695
    %739 = vmatprep.subr.mxu0 0.0
    %740 = vmatpush1.msra.mxu0 %v694
    %741 = vmatprep.subr.mxu0 0.0
    %742 = vmatpush1.msra.mxu0 %v693
    %743 = vmatprep.subr.mxu0 0.0
    %744 = vmatpush1.msra.mxu0 %v692
    %745 = vmatprep.subr.mxu0 0.0
    %746 = vmatpush2.msra.mxu0 0.0
    %747 = vmatprep.subr.mxu0 0.0
    %748 = vmatpush2.msra.mxu0 0.0
    %749 = vmatprep.subr.mxu0 0.0
    %750 = vmatpush2.msra.mxu0 0.0
    %751 = vmatprep.subr.mxu0 0.0
    %752 = vmatpush2.msra.mxu0 0.0
    %753 = vmatprep.subr.mxu0 0.0
    %754 = vmatpush2.msra.mxu0 0.0
    %755 = vmatprep.subr.mxu0 0.0
    %756 = vmatpush2.msra.mxu0 0.0
    %757 = vmatprep.subr.mxu0 0.0
    %758 = vmatpush2.msra.mxu0 0.0
    %759 = vmatprep.subr.mxu0 0.0
    %760 = vmatpush2.msra.mxu0 0.0
    %761 = vmatprep.subr.mxu0 0.0
    %762 = vmatpush2.msra.mxu0 0.0
    %763 = vmatprep.subr.mxu0 0.0
    %764 = vmatpush2.msra.mxu0 0.0
    %765 = vmatprep.subr.mxu0 0.0
    %766 = vmatpush2.msra.mxu0 0.0
    %767 = vmatprep.subr.mxu0 0.0
    %768 = vmatpush2.msra.mxu0 0.0
    %769 = vmatprep.subr.mxu0 0.0
    %770 = vmatpush2.msra.mxu0 0.0
    %771 = vmatprep.subr.mxu0 0.0
    %772 = vmatpush2.msra.mxu0 0.0
    %773 = vmatprep.subr.mxu0 0.0
    %774 = vmatpush2.msra.mxu0 0.0
    %775 = vmatprep.subr.mxu0 0.0
    %776 = vmatpush2.msra.mxu0 0.0
    %777 = vmatprep.mubr.f32.mxu0 0.0
    %778 = vmatmul.mubr.f32.gmra.mxu0 %v702
    %v779 = vpop.f32.mrf.mxu0
    %v780 = vadd.f32 0.0, %v779
    %v781 = vpop.f32.mrf.mxu0
    %782 = vmatprep.mubr.f32.mxu0 0.0
    %783 = vmatmul.mubr.f32.gmra.mxu0 %v705
    %v784 = vpop.f32.mrf.mxu0
    %v785 = vadd.f32 0.0, %v784
    %v786 = vpop.f32.mrf.mxu0
    %787 = vmatprep.mubr.f32.mxu0 0.0
    %788 = vmatmul.mubr.f32.gmra.mxu0 %v708
    %v789 = vpop.f32.mrf.mxu0
    %v790 = vadd.f32 0.0, %v789
    %v791 = vpop.f32.mrf.mxu0
    %792 = vmatprep.mubr.f32.mxu0 0.0
    %793 = vmatmul.mubr.f32.gmra.mxu0 %v711
    %v794 = vpop.f32.mrf.mxu0
    %v795 = vadd.f32 0.0, %v794
    %v796 = vpop.f32.mrf.mxu0
    %797 = vdwg.mxu0
    %798 = vadd.xlane.f32.xlu0 %v780
    %v799 = vpop.xlane.xlu0 %798
    %800 = vadd.xlane.f32.xlu0 %v785
    %v801 = vpop.xlane.xlu0 %800
    %802 = vadd.xlane.f32.xlu0 %v790
    %v803 = vpop.xlane.xlu0 %802
    %804 = vadd.xlane.f32.xlu0 %v795
    %v805 = vpop.xlane.xlu0 %804
    %v806 = vmul.f32 %v780, %v780
    %v807 = vmul.f32 %v785, %v785
    %v808 = vmul.f32 %v790, %v790
    %v809 = vmul.f32 %v795, %v795
    %810 = vadd.xlane.f32.xlu0 %v806
    %v811 = vpop.xlane.xlu0 %810
    %812 = vadd.xlane.f32.xlu0 %v807
    %v813 = vpop.xlane.xlu0 %812
    %814 = vadd.xlane.f32.xlu0 %v808
    %v815 = vpop.xlane.xlu0 %814
    %816 = vadd.xlane.f32.xlu0 %v809
    %v817 = vpop.xlane.xlu0 %816
    %v818 = vmul.f32 %v799, 0.0078125
    %v819 = vmul.f32 %v801, 0.0078125
    %v820 = vmul.f32 %v803, 0.0078125
    %v821 = vmul.f32 %v805, 0.0078125
    %v822 = vmul.f32 %v811, 0.0078125
    %v823 = vmul.f32 %v813, 0.0078125
    %v824 = vmul.f32 %v815, 0.0078125
    %v825 = vmul.f32 %v817, 0.0078125
    %v826 = vmul.f32 %v818, %v818
    %v827 = vmul.f32 %v819, %v819
    %v828 = vmul.f32 %v820, %v820
    %v829 = vmul.f32 %v821, %v821
    %v830 = vsub.f32 %v822, %v826
    %v831 = vsub.f32 %v823, %v827
    %v832 = vsub.f32 %v824, %v828
    %v833 = vsub.f32 %v825, %v829
    %v834 = vmax.f32 %v830, 0.0
    %v835 = vmax.f32 %v831, 0.0
    %v836 = vmax.f32 %v832, 0.0
    %v837 = vmax.f32 %v833, 0.0
    %v838 = vadd.f32 %v834, 1e-05
    %v839 = vadd.f32 %v835, 1e-05
    %v840 = vadd.f32 %v836, 1e-05
    %v841 = vadd.f32 %v837, 1e-05
    %v842 = vrsqrt.pop %v838
    %v843 = vrsqrt.pop %v839
    %v844 = vrsqrt.pop %v840
    %v845 = vrsqrt.pop %v841
    %v846 = vmul.f32 %v30, %v842
    %v847 = vmul.f32 %v31, %v843
    %v848 = vmul.f32 %v32, %v844
    %v849 = vmul.f32 %v33, %v845
    %v850 = vmul.f32 %v846, %v818
    %v851 = vmul.f32 %v847, %v819
    %v852 = vmul.f32 %v848, %v820
    %v853 = vmul.f32 %v849, %v821
    %858 = vrot.lane.b32.xlu0 %v850, 1
    %v859 = vpop.permute.xlu0 %858
    %860 = vrot.lane.b32.xlu0 %v851, 1
    %v861 = vpop.permute.xlu0 %860
    %862 = vrot.lane.b32.xlu0 %v852, 1
    %v863 = vpop.permute.xlu0 %862
    %864 = vrot.lane.b32.xlu0 %v853, 1
    %v865 = vpop.permute.xlu0 %864
    %v870 = vsub.f32 %v30, %v859
    %v871 = vsub.f32 %v31, %v861
    %v872 = vsub.f32 %v32, %v863
    %v873 = vsub.f32 %v33, %v865
    %875 = vset.pattern.permute.xlu0 2
    %876 = vperm.xlu0 %875, %v846
    %v877 = vpop.permute.xlu0 %876
    %880 = vset.pattern.permute.xlu0 2
    %881 = vperm.xlu0 %880, %v847
    %v882 = vpop.permute.xlu0 %881
    %885 = vset.pattern.permute.xlu0 2
    %886 = vperm.xlu0 %885, %v848
    %v887 = vpop.permute.xlu0 %886
    %890 = vset.pattern.permute.xlu0 2
    %891 = vperm.xlu0 %890, %v849
    %v892 = vpop.permute.xlu0 %891
    %v894 = vmul.f32 %v780, %v877
    %v895 = vmul.f32 %v785, %v882
    %v896 = vmul.f32 %v790, %v887
    %v897 = vmul.f32 %v795, %v892
    %899 = vset.pattern.permute.xlu0 3
    %900 = vperm.xlu0 %899, %v870
    %v901 = vpop.permute.xlu0 %900
    %904 = vset.pattern.permute.xlu0 3
    %905 = vperm.xlu0 %904, %v871
    %v906 = vpop.permute.xlu0 %905
    %909 = vset.pattern.permute.xlu0 3
    %910 = vperm.xlu0 %909, %v872
    %v911 = vpop.permute.xlu0 %910
    %914 = vset.pattern.permute.xlu0 3
    %915 = vperm.xlu0 %914, %v873
    %v916 = vpop.permute.xlu0 %915
    %v918 = vadd.f32 %v894, %v901
    %v919 = vadd.f32 %v895, %v906
    %v920 = vadd.f32 %v896, %v911
    %v921 = vadd.f32 %v897, %v916
    %v922 = vmax.f32 %v918, 0.0
    %v923 = vmax.f32 %v919, 0.0
    %v924 = vmax.f32 %v920, 0.0
    %v925 = vmax.f32 %v921, 0.0
    %s926 = scalar_lea.vmem [#allocation2], 64
    %v927 = vld [vmem:[%s926] sm:$0xff]
    %v928 = vld [vmem:[%s926 + $0x8] sm:$0xff]
    %v929 = vld [vmem:[%s926 + $0x10] sm:$0xff]
    %v930 = vld [vmem:[%s926 + $0x18] sm:$0xff]
    %v932 = vsel %vm470, %v927, 0
    %v935 = vsel %vm470, %v928, 0
    %v938 = vsel %vm470, %v929, 0
    %v941 = vsel %vm470, %v930, 0
    %943 = vmatprep.subr.mxu0 0.0
    %944 = vmatpush1.msra.mxu0 0.0
    %945 = vmatprep.subr.mxu0 0.0
    %946 = vmatpush1.msra.mxu0 0.0
    %947 = vmatprep.subr.mxu0 0.0
    %948 = vmatpush1.msra.mxu0 0.0
    %949 = vmatprep.subr.mxu0 0.0
    %950 = vmatpush1.msra.mxu0 0.0
    %951 = vmatprep.subr.mxu0 0.0
    %952 = vmatpush1.msra.mxu0 0.0
    %953 = vmatprep.subr.mxu0 0.0
    %954 = vmatpush1.msra.mxu0 0.0
    %955 = vmatprep.subr.mxu0 0.0
    %956 = vmatpush1.msra.mxu0 0.0
    %957 = vmatprep.subr.mxu0 0.0
    %958 = vmatpush1.msra.mxu0 0.0
    %959 = vmatprep.subr.mxu0 0.0
    %960 = vmatpush1.msra.mxu0 0.0
    %961 = vmatprep.subr.mxu0 0.0
    %962 = vmatpush1.msra.mxu0 0.0
    %963 = vmatprep.subr.mxu0 0.0
    %964 = vmatpush1.msra.mxu0 0.0
    %965 = vmatprep.subr.mxu0 0.0
    %966 = vmatpush1.msra.mxu0 0.0
    %967 = vmatprep.subr.mxu0 0.0
    %968 = vmatpush1.msra.mxu0 %v925
    %969 = vmatprep.subr.mxu0 0.0
    %970 = vmatpush1.msra.mxu0 %v924
    %971 = vmatprep.subr.mxu0 0.0
    %972 = vmatpush1.msra.mxu0 %v923
    %973 = vmatprep.subr.mxu0 0.0
    %974 = vmatpush1.msra.mxu0 %v922
    %975 = vmatprep.subr.mxu0 0.0
    %976 = vmatpush2.msra.mxu0 0.0
    %977 = vmatprep.subr.mxu0 0.0
    %978 = vmatpush2.msra.mxu0 0.0
    %979 = vmatprep.subr.mxu0 0.0
    %980 = vmatpush2.msra.mxu0 0.0
    %981 = vmatprep.subr.mxu0 0.0
    %982 = vmatpush2.msra.mxu0 0.0
    %983 = vmatprep.subr.mxu0 0.0
    %984 = vmatpush2.msra.mxu0 0.0
    %985 = vmatprep.subr.mxu0 0.0
    %986 = vmatpush2.msra.mxu0 0.0
    %987 = vmatprep.subr.mxu0 0.0
    %988 = vmatpush2.msra.mxu0 0.0
    %989 = vmatprep.subr.mxu0 0.0
    %990 = vmatpush2.msra.mxu0 0.0
    %991 = vmatprep.subr.mxu0 0.0
    %992 = vmatpush2.msra.mxu0 0.0
    %993 = vmatprep.subr.mxu0 0.0
    %994 = vmatpush2.msra.mxu0 0.0
    %995 = vmatprep.subr.mxu0 0.0
    %996 = vmatpush2.msra.mxu0 0.0
    %997 = vmatprep.subr.mxu0 0.0
    %998 = vmatpush2.msra.mxu0 0.0
    %999 = vmatprep.subr.mxu0 0.0
    %1000 = vmatpush2.msra.mxu0 0.0
    %1001 = vmatprep.subr.mxu0 0.0
    %1002 = vmatpush2.msra.mxu0 0.0
    %1003 = vmatprep.subr.mxu0 0.0
    %1004 = vmatpush2.msra.mxu0 0.0
    %1005 = vmatprep.subr.mxu0 0.0
    %1006 = vmatpush2.msra.mxu0 0.0
    %1007 = vmatprep.mubr.f32.mxu0 0.0
    %1008 = vmatmul.mubr.f32.gmra.mxu0 %v932
    %v1009 = vpop.f32.mrf.mxu0
    %v1010 = vadd.f32 0.0, %v1009
    %v1011 = vpop.f32.mrf.mxu0
    %1012 = vmatprep.mubr.f32.mxu0 0.0
    %1013 = vmatmul.mubr.f32.gmra.mxu0 %v935
    %v1014 = vpop.f32.mrf.mxu0
    %v1015 = vadd.f32 0.0, %v1014
    %v1016 = vpop.f32.mrf.mxu0
    %1017 = vmatprep.mubr.f32.mxu0 0.0
    %1018 = vmatmul.mubr.f32.gmra.mxu0 %v938
    %v1019 = vpop.f32.mrf.mxu0
    %v1020 = vadd.f32 0.0, %v1019
    %v1021 = vpop.f32.mrf.mxu0
    %1022 = vmatprep.mubr.f32.mxu0 0.0
    %1023 = vmatmul.mubr.f32.gmra.mxu0 %v941
    %v1024 = vpop.f32.mrf.mxu0
    %v1025 = vadd.f32 0.0, %v1024
    %v1026 = vpop.f32.mrf.mxu0
    %1027 = vdwg.mxu0
    %1028 = vadd.xlane.f32.xlu0 %v1010
    %v1029 = vpop.xlane.xlu0 %1028
    %1030 = vadd.xlane.f32.xlu0 %v1015
    %v1031 = vpop.xlane.xlu0 %1030
    %1032 = vadd.xlane.f32.xlu0 %v1020
    %v1033 = vpop.xlane.xlu0 %1032
    %1034 = vadd.xlane.f32.xlu0 %v1025
    %v1035 = vpop.xlane.xlu0 %1034
    %v1036 = vmul.f32 %v1010, %v1010
    %v1037 = vmul.f32 %v1015, %v1015
    %v1038 = vmul.f32 %v1020, %v1020
    %v1039 = vmul.f32 %v1025, %v1025
    %1040 = vadd.xlane.f32.xlu0 %v1036
    %v1041 = vpop.xlane.xlu0 %1040
    %1042 = vadd.xlane.f32.xlu0 %v1037
    %v1043 = vpop.xlane.xlu0 %1042
    %1044 = vadd.xlane.f32.xlu0 %v1038
    %v1045 = vpop.xlane.xlu0 %1044
    %1046 = vadd.xlane.f32.xlu0 %v1039
    %v1047 = vpop.xlane.xlu0 %1046
    %v1048 = vmul.f32 %v1029, 0.0078125
    %v1049 = vmul.f32 %v1031, 0.0078125
    %v1050 = vmul.f32 %v1033, 0.0078125
    %v1051 = vmul.f32 %v1035, 0.0078125
    %v1052 = vmul.f32 %v1041, 0.0078125
    %v1053 = vmul.f32 %v1043, 0.0078125
    %v1054 = vmul.f32 %v1045, 0.0078125
    %v1055 = vmul.f32 %v1047, 0.0078125
    %v1056 = vmul.f32 %v1048, %v1048
    %v1057 = vmul.f32 %v1049, %v1049
    %v1058 = vmul.f32 %v1050, %v1050
    %v1059 = vmul.f32 %v1051, %v1051
    %v1060 = vsub.f32 %v1052, %v1056
    %v1061 = vsub.f32 %v1053, %v1057
    %v1062 = vsub.f32 %v1054, %v1058
    %v1063 = vsub.f32 %v1055, %v1059
    %v1064 = vmax.f32 %v1060, 0.0
    %v1065 = vmax.f32 %v1061, 0.0
    %v1066 = vmax.f32 %v1062, 0.0
    %v1067 = vmax.f32 %v1063, 0.0
    %v1068 = vadd.f32 %v1064, 1e-05
    %v1069 = vadd.f32 %v1065, 1e-05
    %v1070 = vadd.f32 %v1066, 1e-05
    %v1071 = vadd.f32 %v1067, 1e-05
    %v1072 = vrsqrt.pop %v1068
    %v1073 = vrsqrt.pop %v1069
    %v1074 = vrsqrt.pop %v1070
    %v1075 = vrsqrt.pop %v1071
    %v1076 = vmul.f32 %v30, %v1072
    %v1077 = vmul.f32 %v31, %v1073
    %v1078 = vmul.f32 %v32, %v1074
    %v1079 = vmul.f32 %v33, %v1075
    %v1080 = vmul.f32 %v1076, %v1048
    %v1081 = vmul.f32 %v1077, %v1049
    %v1082 = vmul.f32 %v1078, %v1050
    %v1083 = vmul.f32 %v1079, %v1051
    %1088 = vrot.lane.b32.xlu0 %v1080, 1
    %v1089 = vpop.permute.xlu0 %1088
    %1090 = vrot.lane.b32.xlu0 %v1081, 1
    %v1091 = vpop.permute.xlu0 %1090
    %1092 = vrot.lane.b32.xlu0 %v1082, 1
    %v1093 = vpop.permute.xlu0 %1092
    %1094 = vrot.lane.b32.xlu0 %v1083, 1
    %v1095 = vpop.permute.xlu0 %1094
    %v1100 = vsub.f32 %v30, %v1089
    %v1101 = vsub.f32 %v31, %v1091
    %v1102 = vsub.f32 %v32, %v1093
    %v1103 = vsub.f32 %v33, %v1095
    %1105 = vset.pattern.permute.xlu0 4
    %1106 = vperm.xlu0 %1105, %v1076
    %v1107 = vpop.permute.xlu0 %1106
    %1110 = vset.pattern.permute.xlu0 4
    %1111 = vperm.xlu0 %1110, %v1077
    %v1112 = vpop.permute.xlu0 %1111
    %1115 = vset.pattern.permute.xlu0 4
    %1116 = vperm.xlu0 %1115, %v1078
    %v1117 = vpop.permute.xlu0 %1116
    %1120 = vset.pattern.permute.xlu0 4
    %1121 = vperm.xlu0 %1120, %v1079
    %v1122 = vpop.permute.xlu0 %1121
    %v1124 = vmul.f32 %v1010, %v1107
    %v1125 = vmul.f32 %v1015, %v1112
    %v1126 = vmul.f32 %v1020, %v1117
    %v1127 = vmul.f32 %v1025, %v1122
    %1129 = vset.pattern.permute.xlu0 5
    %1130 = vperm.xlu0 %1129, %v1100
    %v1131 = vpop.permute.xlu0 %1130
    %1134 = vset.pattern.permute.xlu0 5
    %1135 = vperm.xlu0 %1134, %v1101
    %v1136 = vpop.permute.xlu0 %1135
    %1139 = vset.pattern.permute.xlu0 5
    %1140 = vperm.xlu0 %1139, %v1102
    %v1141 = vpop.permute.xlu0 %1140
    %1144 = vset.pattern.permute.xlu0 5
    %1145 = vperm.xlu0 %1144, %v1103
    %v1146 = vpop.permute.xlu0 %1145
    %v1148 = vadd.f32 %v1124, %v1131
    %v1149 = vadd.f32 %v1125, %v1136
    %v1150 = vadd.f32 %v1126, %v1141
    %v1151 = vadd.f32 %v1127, %v1146
    %v1152 = vmax.f32 %v1148, 0.0
    %v1153 = vmax.f32 %v1149, 0.0
    %v1154 = vmax.f32 %v1150, 0.0
    %v1155 = vmax.f32 %v1151, 0.0
    %1156 = vset.pattern.permute.xlu0 6
    %1157 = vperm.xlu0 %1156, %v30
    %v1158 = vpop.permute.xlu0 %1157
    %1160 = vset.pattern.permute.xlu0 6
    %1161 = vperm.xlu0 %1160, %v31
    %v1162 = vpop.permute.xlu0 %1161
    %1165 = vset.pattern.permute.xlu0 6
    %1166 = vperm.xlu0 %1165, %v32
    %v1167 = vpop.permute.xlu0 %1166
    %1170 = vset.pattern.permute.xlu0 6
    %1171 = vperm.xlu0 %1170, %v33
    %v1172 = vpop.permute.xlu0 %1171
    %v1174 = vmul.f32 %v1152, %v1158
    %v1175 = vmul.f32 %v1153, %v1162
    %v1176 = vmul.f32 %v1154, %v1167
    %v1177 = vmul.f32 %v1155, %v1172
    %v1178 = vadd.f32 %v1174, %v1175
    %v1179 = vadd.f32 %v1178, %v1176
    %v1180 = vadd.f32 %v1179, %v1177
    %v1181 = vrot.slane %v1180, 4
    %v1182 = vadd.f32 %v1180, %v1181
    %v1183 = vrot.slane %v1182, 2
    %v1184 = vadd.f32 %v1182, %v1183
    %v1185 = vrot.slane %v1184, 1
    %v1186 = vadd.f32 %v1184, %v1185
    %1187 = vset.pattern.permute.xlu0 7
    %1188 = vperm.xlu0 %1187, %v32
    %v1189 = vpop.permute.xlu0 %1188
    %v1191 = vadd.f32 %v1186, %v1189
    %1192 = vst [vmem:[#allocation5] sm:$0x1] %v1191
    // Predicated region
    $region18: #{tpu_custom_call.1} parent=1 // pred_check
      _
    $region19: #{tpu_custom_call.1} parent=1 // pred_check_branch
      %1194 = sbr.rel (0) target = $region21
    $region20: #{tpu_custom_call.1} parent=1 // pred_region
      %s1196 = ssub.s32 16, 16
      %1197 = vsyncadd [#allocation4], %s1196
      %s1199 = sshll.u32 [#allocation5], 4
      %s1200 = int_to_ptr.vmem [resolvable:$true] %s1199
      %1202 = dma.vmem_to_hbm [thread:$0]  %s1200, 16, %s3, [#allocation4]
    $region21: #{tpu_custom_call.1} parent=1 // pred_fallthru
      _
    // Predicated region
    $region22: #{tpu_custom_call.1} parent=1 // pred_check
      _
    $region23: #{tpu_custom_call.1} parent=1 // pred_check_branch
      %1204 = sbr.rel (0) target = $region25
    $region24: #{tpu_custom_call.1} parent=1 // pred_region
      %1205 = dma.done [#allocation4], 16
    $region25: #{tpu_custom_call.1} parent=1 // pred_fallthru
      _
    %1206 = vsyncpa [#allocation3], 1
    %1207 = vsyncpa [#allocation4], 1

</llo_original>
